<compile_context>
chip_gen: v7x
topology: tpu7x:2x2x1
jax: 0.10.0
libtpu: 0.0.40
codegen_flags: <defaults>
</compile_context>

<pallas_src>
import jax
import jax.numpy as jnp
from jax.experimental import pallas as pl
from jax.experimental.pallas import tpu as pltpu


def _cdiv(a, b):
    return (a + b - 1) // b


def _round_up(a, b):
    return _cdiv(a, b) * b


def _num_tensorcores_per_chip():
    # Best-effort: v7x has 2 TensorCores per chip, v5e/v6e have 1.
    try:
        kind = jax.devices()[0].device_kind.lower()
        if "v7" in kind:
            return 2
    except Exception:
        pass
    return 1


def hadamard2_kernel(x1_ref, x2_ref, p_ref, o_ref):
    # Elementwise hot path: VPU mul/add in f32 + EUP tanh, lane-dense store.
    x1 = x1_ref[...].astype(jnp.float32)
    x2 = x2_ref[...].astype(jnp.float32)
    k1 = p_ref[0:1, :]          # (1, Dblk) -> broadcasts over batch rows
    k2 = p_ref[1:2, :]
    b = p_ref[2:3, :]
    o_ref[...] = jnp.tanh(x1 * k1 + x2 * k2 + b).astype(o_ref.dtype)


def hadamard2(x1, x2, kernel1, kernel2, bias, *, block_rows=None, block_cols=None,
              use_pallas=None):
    assert x1.shape == x2.shape and x1.ndim == 2
    B, D = x1.shape
    assert kernel1.shape == (D,) and kernel2.shape == (D,) and bias.shape == (D,)

    out_dtype = x1.dtype
    itemsize = jnp.dtype(out_dtype).itemsize
    total_bytes = 3 * B * D * itemsize          # 2 input streams + 1 output stream

    k1f = kernel1.astype(jnp.float32)
    k2f = kernel2.astype(jnp.float32)
    bf = bias.astype(jnp.float32)

    # ---- tiny-shape fallback: let XLA fuse one elementwise pass ----
    if use_pallas is None:
        use_pallas = total_bytes >= (256 << 10)
    if not use_pallas:
        acc = (x1.astype(jnp.float32) * k1f[None, :]
               + x2.astype(jnp.float32) * k2f[None, :]
               + bf[None, :])
        return jnp.tanh(acc).astype(out_dtype)

    # ---- per-stream byte target (one pipeline buffer) ----
    target_bytes = 4 << 20

    # ---- column (lane) tiling: prefer full-D rows; split only if an 8-row
    #      full-D tile alone would exceed the per-stream budget ----
    if block_cols is None:
        if 8 * D * itemsize <= target_bytes:
            block_cols = D
        else:
            block_cols = max(128, ((target_bytes // (8 * itemsize)) // 128) * 128)
    if block_cols >= D:
        block_cols = D            # full-dim block: no 128-divisibility needed
    else:
        block_cols = max(128, (block_cols // 128) * 128)
    n_col_blocks = _cdiv(D, block_cols)

    # ---- row (sublane) tiling: sized by bytes, multiple of 8 (or full B) ----
    if block_rows is None:
        block_rows = max(8, target_bytes // max(1, block_cols * itemsize))
    if block_rows >= B:
        block_rows = B            # full-dim block: no 8-divisibility needed
    else:
        block_rows = max(8, (block_rows // 8) * 8)
    n_row_blocks = _cdiv(B, block_rows)

    # ---- feed both TensorCores on v7x, but only when the work is sizable ----
    if (n_row_blocks == 1 and _num_tensorcores_per_chip() >= 2
            and total_bytes >= (4 << 20) and B >= 16):
        block_rows = max(8, _round_up(_cdiv(B, 2), 8))
        n_row_blocks = _cdiv(B, block_rows)

    # Pack the three per-feature params into one resident (3, D) stream (f32).
    params = jnp.stack([k1f, k2f, bf], axis=0)

    # ---- VMEM budget from actual buffer counts ----
    rr = _round_up(block_rows, 16)            # sublane padding (covers bf16 packing)
    cc = _round_up(block_cols, 128)
    data_bytes = 3 * 2 * rr * cc * itemsize   # 3 data streams x double buffer
    param_bytes = 2 * 8 * cc * 4              # (3 -> 8 sublanes) x f32 x 2 buffers
    vmem_limit = data_bytes + param_bytes + (2 << 20)   # Mosaic internal scratch
    vmem_limit = int(min(max(vmem_limit, 8 << 20), 48 << 20))   # v7x-safe cap

    out = pl.pallas_call(
        hadamard2_kernel,
        out_shape=jax.ShapeDtypeStruct((B, D), out_dtype),
        grid_spec=pltpu.PrefetchScalarGridSpec(
            num_scalar_prefetch=0,
            grid=(n_row_blocks, n_col_blocks),
            in_specs=[
                pl.BlockSpec((block_rows, block_cols), lambda i, j: (i, j)),  # x1
                pl.BlockSpec((block_rows, block_cols), lambda i, j: (i, j)),  # x2
                pl.BlockSpec((3, block_cols), lambda i, j: (0, j)),           # params
            ],
            out_specs=pl.BlockSpec((block_rows, block_cols), lambda i, j: (i, j)),
        ),
        compiler_params=pltpu.CompilerParams(
            dimension_semantics=("parallel", "parallel"),
            vmem_limit_bytes=vmem_limit,
        ),
    )(x1, x2, params)
    return out


if __name__ == "__main__":
    key = jax.random.PRNGKey(0)
    k_x1, k_x2, k_w1, k_w2, k_y1, k_y2, k_z1, k_z2, k_u1, k_u2 = jax.random.split(key, 10)

    def ref_fn(a, b, w1, w2, bb, dt):
        r = jnp.tanh(a.astype(jnp.float32) * w1[None, :]
                     + b.astype(jnp.float32) * w2[None, :]
                     + bb[None, :])
        return r.astype(dt)

    # ---- test 1: f32, module-sized shapes (batch=16, dim=128), Pallas path ----
    B, D = 16, 128
    x1 = jax.random.normal(k_x1, (B, D), dtype=jnp.float32)
    x2 = jax.random.normal(k_x2, (B, D), dtype=jnp.float32)
    kernel1 = jax.random.normal(k_w1, (D,), dtype=jnp.float32)
    kernel2 = jax.random.normal(k_w2, (D,), dtype=jnp.float32)
    bias = jnp.zeros((D,), dtype=jnp.float32)

    out = jax.block_until_ready(hadamard2(x1, x2, kernel1, kernel2, bias, use_pallas=True))
    ref = ref_fn(x1, x2, kernel1, kernel2, bias, jnp.float32)
    assert out.shape == (B, D)
    assert jnp.allclose(out, ref, atol=1e-6, rtol=1e-6)

    # ---- test 2: bf16 I/O + non-divisible batch (full-dim blocks, no padding) ----
    B2 = 37
    y1 = jax.random.normal(k_y1, (B2, D), dtype=jnp.bfloat16)
    y2 = jax.random.normal(k_y2, (B2, D), dtype=jnp.bfloat16)
    out2 = jax.block_until_ready(hadamard2(y1, y2, kernel1, kernel2, bias, use_pallas=True))
    ref2 = ref_fn(y1, y2, kernel1, kernel2, bias, jnp.bfloat16)
    assert out2.shape == (B2, D)
    assert jnp.allclose(out2.astype(jnp.float32), ref2.astype(jnp.float32),
                        atol=2e-2, rtol=2e-2)

    # ---- test 3: multi-block masked-edge path (B and D not tile multiples,
    #      explicit small tiles force partial row AND column blocks) ----
    B3, D3 = 1000, 200
    z1 = jax.random.normal(k_z1, (B3, D3), dtype=jnp.float32)
    z2 = jax.random.normal(k_z2, (B3, D3), dtype=jnp.float32)
    w1 = jax.random.normal(k_u1, (D3,), dtype=jnp.float32)
    w2 = jax.random.normal(k_u2, (D3,), dtype=jnp.float32)
    b3 = jnp.zeros((D3,), dtype=jnp.float32)
    out3 = jax.block_until_ready(
        hadamard2(z1, z2, w1, w2, b3, block_rows=256, block_cols=128, use_pallas=True))
    ref3 = ref_fn(z1, z2, w1, w2, b3, jnp.float32)
    assert out3.shape == (B3, D3)
    assert jnp.allclose(out3, ref3, atol=1e-6, rtol=1e-6)

    # ---- test 4: tiny-shape auto fallback (plain jnp path) ----
    out4 = jax.block_until_ready(hadamard2(x1, x2, kernel1, kernel2, bias))
    assert jnp.allclose(out4, ref, atol=1e-6, rtol=1e-6)

    print("KERNEL_OK")
</pallas_src>

<mosaic_0001>
module attributes {stable_mosaic.version = 11 : i64} {
  func.func @hadamard2_kernel(%arg0: i32, %arg1: i32, %arg2: memref<16x128xf32, #tpu.memory_space<vmem>>, %arg3: memref<16x128xf32, #tpu.memory_space<vmem>>, %arg4: memref<3x128xf32, #tpu.memory_space<vmem>>, %arg5: memref<16x128xf32, #tpu.memory_space<vmem>>) attributes {dimension_semantics = [#tpu.dimension_semantics<parallel>, #tpu.dimension_semantics<parallel>], iteration_bounds = array<i64: 1, 1>, scalar_prefetch = 0 : i64, scratch_operands = 0 : i64, tpu.core_type = #tpu.core_type<tc>, window_params = [{transform_indices = @transform_0, window_bounds = array<i64: 16, 128>}, {transform_indices = @transform_1, window_bounds = array<i64: 16, 128>}, {transform_indices = @transform_2, window_bounds = array<i64: 3, 128>}, {transform_indices = @transform_3, window_bounds = array<i64: 16, 128>}]} {
    %c0 = arith.constant 0 : index
    %c0_0 = arith.constant 0 : index
    %0 = vector.load %arg2[%c0, %c0_0] : memref<16x128xf32, #tpu.memory_space<vmem>>, vector<16x128xf32>
    %c0_1 = arith.constant 0 : index
    %c0_2 = arith.constant 0 : index
    %1 = vector.load %arg3[%c0_1, %c0_2] : memref<16x128xf32, #tpu.memory_space<vmem>>, vector<16x128xf32>
    %c0_3 = arith.constant 0 : index
    %c0_4 = arith.constant 0 : index
    %2 = vector.load %arg4[%c0_3, %c0_4] : memref<3x128xf32, #tpu.memory_space<vmem>>, vector<1x128xf32>
    %c1 = arith.constant 1 : index
    %c0_5 = arith.constant 0 : index
    %3 = vector.load %arg4[%c1, %c0_5] : memref<3x128xf32, #tpu.memory_space<vmem>>, vector<1x128xf32>
    %c2 = arith.constant 2 : index
    %c0_6 = arith.constant 0 : index
    %4 = vector.load %arg4[%c2, %c0_6] : memref<3x128xf32, #tpu.memory_space<vmem>>, vector<1x128xf32>
    %5 = vector.broadcast %2 : vector<1x128xf32> to vector<16x128xf32>
    %6 = arith.mulf %0, %5 : vector<16x128xf32>
    %7 = vector.broadcast %3 : vector<1x128xf32> to vector<16x128xf32>
    %8 = arith.mulf %1, %7 : vector<16x128xf32>
    %9 = arith.addf %6, %8 : vector<16x128xf32>
    %10 = vector.broadcast %4 : vector<1x128xf32> to vector<16x128xf32>
    %11 = arith.addf %9, %10 : vector<16x128xf32>
    %12 = math.tanh %11 : vector<16x128xf32>
    %c0_7 = arith.constant 0 : index
    %c0_8 = arith.constant 0 : index
    %13 = vector.load %arg5[%c0_7, %c0_8] : memref<16x128xf32, #tpu.memory_space<vmem>>, vector<16x128xf32>
    tpu.vector_store %arg5[%c0_7, %c0_8], %12 {strides = array<i32>} : memref<16x128xf32, #tpu.memory_space<vmem>>, vector<16x128xf32>,
    return
  }
  func.func @transform_0(%arg0: i32, %arg1: i32) -> (i32, i32) {
    %c0_i32 = arith.constant 0 : i32
    return %arg0, %arg1 : i32, i32
  }
  func.func @transform_1(%arg0: i32, %arg1: i32) -> (i32, i32) {
    %c0_i32 = arith.constant 0 : i32
    return %arg0, %arg1 : i32, i32
  }
  func.func @transform_2(%arg0: i32, %arg1: i32) -> (i32, i32) {
    %c0_i32 = arith.constant 0 : i32
    %c0_i32_0 = arith.constant 0 : i32
    return %c0_i32, %arg1 : i32, i32
  }
  func.func @transform_3(%arg0: i32, %arg1: i32) -> (i32, i32) {
    %c0_i32 = arith.constant 0 : i32
    return %arg0, %arg1 : i32, i32
  }
}

</mosaic_0001>

<llo_original>
// kernel: tpu_custom_call.1
$region0: #{tpu_custom_call.1}
  #allocation0 [shape = 'u32[]', space=smem, size = 0x4, offset = 0x4, fixed_abs, tag = 'smem constant byte address 0x4 - core index']
  #allocation1 [shape = 'u32[144,128]{1,0:T(1,128)}', space=vmem, size = 0x12000, scoped, tag = 'internal scratch']
  %s0 = inlined_call_operand.hbm [shape: f32[16,128], index: 0, kind: input, shape index: {}]
  %s1 = inlined_call_operand.hbm [shape: f32[16,128], index: 1, kind: input, shape index: {}]
  %s2 = inlined_call_operand.vmem [shape: f32[3,128], index: 2, kind: input, shape index: {}]
  %s3 = inlined_call_operand.hbm [shape: f32[16,128], index: 3, kind: output, shape index: {}]
  %s4 = sld [smem:[#allocation0]]
  $region30: #{tpu_custom_call.1} parent=0
    _
  %s6 = ssub.s32 1, %s4
  %s7 = scalar_select 0, %s6, %s4
  $region1: #{tpu_custom_call.1} parent=0
    #allocation2 [shape = 'u8[8192]{0}', space=vmem, size = 0x2000, scoped, tag = 'input window, operand 0, single buffered']
    #allocation3 [shape = 's32[1]{0}', space=sflag, size = 0x4, scoped, tag = 'scoped memory for tpu_custom_call.1']
    #allocation4 [shape = 's32[1]{0}', space=sflag, size = 0x4, scoped, tag = 'scoped memory for tpu_custom_call.1']
    #allocation5 [shape = 'u8[8192]{0}', space=vmem, size = 0x2000, scoped, tag = 'input window, operand 1, single buffered']
    #allocation6 [shape = 's32[1]{0}', space=sflag, size = 0x4, scoped, tag = 'scoped memory for tpu_custom_call.1']
    #allocation7 [shape = 'u8[8192]{0}', space=vmem, size = 0x2000, scoped, tag = 'output window, operand 0, single buffered']
    %8 = vsyncpa [#allocation3], 0
    %9 = vsyncpa [#allocation6], 0
    %10 = vsyncpa [#allocation4], 0
    // Predicated region
    $region2: #{tpu_custom_call.1} parent=1 // pred_check
      _
    $region3: #{tpu_custom_call.1} parent=1 // pred_check_branch
      %12 = sbr.rel (0) target = $region5
    $region4: #{tpu_custom_call.1} parent=1 // pred_region
      %s14 = ssub.s32 256, 256
      %15 = vsyncadd [#allocation3], %s14
      %s16 = sshll.u32 [#allocation2], 4
      %s17 = int_to_ptr.vmem [resolvable:$true] %s16
      %22 = dma.hbm_to_vmem [thread:$0]  %s0, 256, %s17, [#allocation3], 128, 128, 8
    $region5: #{tpu_custom_call.1} parent=1 // pred_fallthru
      _
    // Predicated region
    $region6: #{tpu_custom_call.1} parent=1 // pred_check
      _
    $region7: #{tpu_custom_call.1} parent=1 // pred_check_branch
      %24 = sbr.rel (0) target = $region9
    $region8: #{tpu_custom_call.1} parent=1 // pred_region
      %s26 = ssub.s32 256, 256
      %27 = vsyncadd [#allocation6], %s26
      %s28 = sshll.u32 [#allocation5], 4
      %s29 = int_to_ptr.vmem [resolvable:$true] %s28
      %34 = dma.hbm_to_vmem [thread:$0]  %s1, 256, %s29, [#allocation6], 128, 128, 8
    $region9: #{tpu_custom_call.1} parent=1 // pred_fallthru
      _
    // Predicated region
    $region10: #{tpu_custom_call.1} parent=1 // pred_check
      _
    $region11: #{tpu_custom_call.1} parent=1 // pred_check_branch
      %36 = sbr.rel (0) target = $region13
    $region12: #{tpu_custom_call.1} parent=1 // pred_region
      _
    $region13: #{tpu_custom_call.1} parent=1 // pred_fallthru
      _
    // Predicated region
    $region14: #{tpu_custom_call.1} parent=1 // pred_check
      _
    $region15: #{tpu_custom_call.1} parent=1 // pred_check_branch
      %38 = sbr.rel (0) target = $region17
    $region16: #{tpu_custom_call.1} parent=1 // pred_region
      %39 = dma.done [#allocation3], 256
    $region17: #{tpu_custom_call.1} parent=1 // pred_fallthru
      _
    // Predicated region
    $region18: #{tpu_custom_call.1} parent=1 // pred_check
      _
    $region19: #{tpu_custom_call.1} parent=1 // pred_check_branch
      %41 = sbr.rel (0) target = $region21
    $region20: #{tpu_custom_call.1} parent=1 // pred_region
      %42 = dma.done [#allocation6], 256
    $region21: #{tpu_custom_call.1} parent=1 // pred_fallthru
      _
    %v43 = vld [vmem:[#allocation2] sm:$0xff]
    %v44 = vld [vmem:[#allocation2 + $0x8] sm:$0xff]
    %v45 = vld [vmem:[#allocation5] sm:$0xff]
    %v46 = vld [vmem:[#allocation5 + $0x8] sm:$0xff]
    %v47 = vld [vmem:[%s2] sm:$0x1]
    %v48 = vld [vmem:[%s2 + $0x1] sm:$0x1]
    %v49 = vld [vmem:[%s2 + $0x2] sm:$0x1]
    %v50 = vlaneseq
    %v51 = vshrl.u32 %v50, 7
    %v52 = vsub.s32 0, %v51
    %v53 = vrot.slane %v47, %v52
    %v54 = vmul.f32 %v43, %v53
    %v55 = vmul.f32 %v44, %v53
    %v56 = vlaneseq
    %v57 = vshrl.u32 %v56, 7
    %v58 = vsub.s32 0, %v57
    %v59 = vrot.slane %v48, %v58
    %v60 = vmul.f32 %v45, %v59
    %v61 = vmul.f32 %v46, %v59
    %v62 = vadd.f32 %v54, %v60
    %v63 = vadd.f32 %v55, %v61
    %v64 = vlaneseq
    %v65 = vshrl.u32 %v64, 7
    %v66 = vsub.s32 0, %v65
    %v67 = vrot.slane %v49, %v66
    %v68 = vadd.f32 %v62, %v67
    %v69 = vadd.f32 %v63, %v67
    %v70 = vtanh.pop %v68
    %v71 = vtanh.pop %v69
    %72 = vst [vmem:[#allocation7] sm:$0xff] %v70
    %73 = vst [vmem:[#allocation7 + $0x8] sm:$0xff] %v71
    // Predicated region
    $region22: #{tpu_custom_call.1} parent=1 // pred_check
      _
    $region23: #{tpu_custom_call.1} parent=1 // pred_check_branch
      %75 = sbr.rel (0) target = $region25
    $region24: #{tpu_custom_call.1} parent=1 // pred_region
      %s77 = ssub.s32 256, 256
      %78 = vsyncadd [#allocation4], %s77
      %s79 = sshll.u32 [#allocation7], 4
      %s80 = int_to_ptr.vmem [resolvable:$true] %s79
      %85 = dma.vmem_to_hbm [thread:$0]  %s80, 256, %s3, [#allocation4], 128, 128, 8
    $region25: #{tpu_custom_call.1} parent=1 // pred_fallthru
      _
    // Predicated region
    $region26: #{tpu_custom_call.1} parent=1 // pred_check
      _
    $region27: #{tpu_custom_call.1} parent=1 // pred_check_branch
      %87 = sbr.rel (0) target = $region29
    $region28: #{tpu_custom_call.1} parent=1 // pred_region
      %88 = dma.done [#allocation4], 256
    $region29: #{tpu_custom_call.1} parent=1 // pred_fallthru
      _
    %89 = vsyncpa [#allocation3], 1
    %90 = vsyncpa [#allocation6], 1
    %91 = vsyncpa [#allocation4], 1

</llo_original>
